<compile_context>
chip_gen: v5e
topology: v5e:2x2
jax: 0.10.0
libtpu: 0.0.40
codegen_flags: <defaults>
</compile_context>

<pallas_src>
import numpy as np
import jax
import jax.numpy as jnp
from jax import lax
from jax.experimental import pallas as pl
from jax.experimental.pallas import tpu as pltpu


# ----------------------------- Pallas kernel --------------------------------

def make_astar_kernel(T: int, B: int, H: int):
    """LSTM-over-time + last-step gather + fc1(relu) + fc2(sigmoid)."""

    def kernel(x_ref,      # [T*B, E] embedded, sorted, padded sequence (time-major, flattened)
               lens_ref,   # [B, 1] int32 sequence lengths (sorted desc)
               lastg_ref,  # [B, E] last-goal embedding (sorted order)
               w_ih_ref,   # [E, 4H]
               w_hh_ref,   # [H, 4H]
               b_ref,      # [1, 4H]  (b_ih + b_hh)
               h0_ref,     # [B, H]
               c0_ref,     # [B, H]
               w1a_ref,    # [H, 64]   fc1 weight, LSTM-output half
               w1b_ref,    # [E, 64]   fc1 weight, last-goal-embed half
               b1_ref,     # [1, 64]
               w2_ref,     # [64, O]
               b2_ref,     # [1, O]
               out_ref):   # [B, O]

        # --- hoisted input projection: one well-shaped MXU call + one bias
        #     broadcast, instead of one per timestep inside the recurrence ---
        gates_x = (jnp.dot(x_ref[...], w_ih_ref[...],
                           preferred_element_type=jnp.float32)
                   + b_ref[...])                               # [T*B, 4H]

        # --- hoisted loop-invariant work ---
        lens_m1 = lens_ref[...] - 1                            # [B, 1]
        w_hh = w_hh_ref[...]                                   # [H, 4H]

        h = h0_ref[...]                                        # [B, H]
        c = c0_ref[...]                                        # [B, H]
        last = jnp.zeros_like(h)                               # [B, H]

        # --- fully-unrolled recurrence (T is a compile-time constant) ---
        for t in range(T):
            # per-step slice is sublane-aligned (rows t*B .. t*B+B, B == 8)
            gates = gates_x[t * B:(t + 1) * B, :] + jnp.dot(
                h, w_hh, preferred_element_type=jnp.float32)   # [B, 4H]

            # two full-vreg transcendentals, then static quarter slices
            sig_all = jax.nn.sigmoid(gates)
            tanh_all = jnp.tanh(gates)
            i_g = sig_all[:, 0 * H:1 * H]
            f_g = sig_all[:, 1 * H:2 * H]
            g_g = tanh_all[:, 2 * H:3 * H]
            o_g = sig_all[:, 3 * H:4 * H]

            c = f_g * c + i_g * g_g
            h = o_g * jnp.tanh(c)

            # grab hidden state at the last valid timestep of each sequence
            last = jnp.where(lens_m1 == t, h, last)

        # fc1 over concat([lstm_out, last_goal_embed]) == two partial matmuls
        hid = (jnp.dot(last, w1a_ref[...], preferred_element_type=jnp.float32)
               + jnp.dot(lastg_ref[...], w1b_ref[...],
                         preferred_element_type=jnp.float32)
               + b1_ref[...])
        hid = jnp.maximum(hid, 0.0)                            # ReLU
        logits = (jnp.dot(hid, w2_ref[...],
                          preferred_element_type=jnp.float32) + b2_ref[...])
        out_ref[...] = jax.nn.sigmoid(logits)

    return kernel


def astar_type_pallas(x_tbe, lens, lastg, w_ih, w_hh, b, h0, c0,
                      w1a, w1b, b1, w2, b2):
    T, B, E = x_tbe.shape
    H = h0.shape[1]
    O = w2.shape[1]
    # flatten the time axis into the sublane axis so the kernel can do the
    # whole input projection as one matmul (free reshape on the host side)
    x2d = jnp.reshape(x_tbe, (T * B, E))
    vmem = pl.BlockSpec(memory_space=pltpu.MemorySpace.VMEM)
    return pl.pallas_call(
        make_astar_kernel(T, B, H),
        out_shape=jax.ShapeDtypeStruct((B, O), jnp.float32),
        in_specs=[vmem] * 13,
        out_specs=vmem,
    )(x2d, lens, lastg, w_ih, w_hh, b, h0, c0, w1a, w1b, b1, w2, b2)


# ----------------------------- pure-JAX reference ----------------------------

def astar_type_ref(x_tbe, lens, lastg, w_ih, w_hh, b, h0, c0,
                   w1a, w1b, b1, w2, b2):
    T = x_tbe.shape[0]
    h, c = h0, c0
    last = jnp.zeros_like(h0)
    for t in range(T):
        gates = x_tbe[t] @ w_ih + h @ w_hh + b
        H = h0.shape[1]
        i_g = jax.nn.sigmoid(gates[:, 0 * H:1 * H])
        f_g = jax.nn.sigmoid(gates[:, 1 * H:2 * H])
        g_g = jnp.tanh(gates[:, 2 * H:3 * H])
        o_g = jax.nn.sigmoid(gates[:, 3 * H:4 * H])
        c = f_g * c + i_g * g_g
        h = o_g * jnp.tanh(c)
        last = jnp.where((lens - 1) == t, h, last)
    hid = jnp.maximum(last @ w1a + lastg @ w1b + b1, 0.0)
    return jax.nn.sigmoid(hid @ w2 + b2)


# ----------------------------------- main ------------------------------------

if __name__ == "__main__":
    # --- synthetic config ---
    goal_type_size = 10
    embed_size     = 32   # E
    hidden_size    = 32   # H
    output_size    = 8    # O
    n_layers       = 1
    bidirectional  = False
    padding_idx    = goal_type_size

    E, H, O = embed_size, hidden_size, output_size

    # --- deterministic inputs (variable-length goal sequences) ---
    rng = np.random.RandomState(0)
    lengths_list = [7, 5, 4, 6, 3, 2, 7, 1]
    B = len(lengths_list)
    past_goal_seq = [list(rng.randint(0, goal_type_size, size=L))
                     for L in lengths_list]
    last_goal = rng.randint(0, goal_type_size, size=B).astype(np.int32)

    # --- deterministic parameters ---
    key = jax.random.PRNGKey(0)
    ks = jax.random.split(key, 12)
    emb_table = jax.random.normal(ks[0], (goal_type_size + 1, E),
                                  jnp.float32) * 0.1
    # LSTM weights, stored [in, 4H] (transposed from PyTorch's [4H, in])
    w_ih = jax.random.normal(ks[1], (E, 4 * H), jnp.float32) * 0.1
    w_hh = jax.random.normal(ks[2], (H, 4 * H), jnp.float32) * 0.1
    b    = (jax.random.normal(ks[3], (1, 4 * H), jnp.float32) * 0.05)
    # init_hidden (torch.randn + orthogonal/kaiming) -> deterministic init here
    h0 = jax.random.normal(ks[4], (B, H), jnp.float32) * 0.1
    c0 = jax.random.normal(ks[5], (B, H), jnp.float32) * 0.1
    # fc1: [H+E, 64] split into the LSTM-output half and the embed half
    w1a = jax.random.normal(ks[6], (H, 64), jnp.float32) * 0.1
    w1b = jax.random.normal(ks[7], (E, 64), jnp.float32) * 0.1
    b1  = jax.random.normal(ks[8], (1, 64), jnp.float32) * 0.05
    w2  = jax.random.normal(ks[9], (64, O), jnp.float32) * 0.1
    b2  = jax.random.normal(ks[10], (1, O), jnp.float32) * 0.05

    # --- glue: sort-by-length (desc), pad, embed, permute (as in the module) ---
    lengths_np = np.array([len(s) for s in past_goal_seq], dtype=np.int32)
    perm = np.argsort(-lengths_np, kind="stable")
    inv_perm = np.argsort(perm)
    T = int(lengths_np.max())

    padded = np.full((B, T), padding_idx, dtype=np.int32)
    for i, s in enumerate(past_goal_seq):
        padded[i, :len(s)] = s
    padded_sorted = padded[perm]                           # [B, T]
    lens_sorted = lengths_np[perm].reshape(B, 1).astype(np.int32)

    x_embed = jnp.take(emb_table, jnp.asarray(padded_sorted), axis=0)  # [B,T,E]
    x_tbe = jnp.transpose(x_embed, (1, 0, 2)).astype(jnp.float32)      # [T,B,E]
    lastg = jnp.take(emb_table, jnp.asarray(last_goal), axis=0)[jnp.asarray(perm)]
    lens = jnp.asarray(lens_sorted)

    # --- run Pallas kernel ---
    out_sorted = astar_type_pallas(x_tbe, lens, lastg, w_ih, w_hh, b, h0, c0,
                                   w1a, w1b, b1, w2, b2)
    out_sorted = jax.block_until_ready(out_sorted)
    out = out_sorted[jnp.asarray(inv_perm)]                # restore input order

    # --- correctness check against pure-JAX reference ---
    ref_sorted = astar_type_ref(x_tbe, lens, lastg, w_ih, w_hh, b, h0, c0,
                                w1a, w1b, b1, w2, b2)
    ref = ref_sorted[jnp.asarray(inv_perm)]
    np.testing.assert_allclose(np.asarray(out), np.asarray(ref),
                               rtol=1e-2, atol=1e-2)

    print("KERNEL_OK")
</pallas_src>

<mosaic_0001>
module attributes {stable_mosaic.version = 11 : i64} {
  func.func @kernel(%arg0: memref<56x32xf32, #tpu.memory_space<vmem>>, %arg1: memref<8x1xi32, #tpu.memory_space<vmem>>, %arg2: memref<8x32xf32, #tpu.memory_space<vmem>>, %arg3: memref<32x128xf32, #tpu.memory_space<vmem>>, %arg4: memref<32x128xf32, #tpu.memory_space<vmem>>, %arg5: memref<1x128xf32, #tpu.memory_space<vmem>>, %arg6: memref<8x32xf32, #tpu.memory_space<vmem>>, %arg7: memref<8x32xf32, #tpu.memory_space<vmem>>, %arg8: memref<32x64xf32, #tpu.memory_space<vmem>>, %arg9: memref<32x64xf32, #tpu.memory_space<vmem>>, %arg10: memref<1x64xf32, #tpu.memory_space<vmem>>, %arg11: memref<64x8xf32, #tpu.memory_space<vmem>>, %arg12: memref<1x8xf32, #tpu.memory_space<vmem>>, %arg13: memref<8x8xf32, #tpu.memory_space<vmem>>) attributes {dimension_semantics = [], scalar_prefetch = 0 : i64, scratch_operands = 0 : i64, tpu.core_type = #tpu.core_type<tc>} {
    %c0 = arith.constant 0 : index
    %c0_0 = arith.constant 0 : index
    %0 = vector.load %arg0[%c0, %c0_0] : memref<56x32xf32, #tpu.memory_space<vmem>>, vector<56x32xf32>
    %c0_1 = arith.constant 0 : index
    %c0_2 = arith.constant 0 : index
    %1 = vector.load %arg3[%c0_1, %c0_2] : memref<32x128xf32, #tpu.memory_space<vmem>>, vector<32x128xf32>
    %cst = arith.constant dense<0.000000e+00> : vector<56x128xf32>
    %2 = tpu.matmul %0, %1, %cst {dimension_numbers = #tpu.dot_dimension_numbers<[1], [0], [0], [1], [0, 0, 1, 1], [], []>} : vector<56x32xf32>, vector<32x128xf32>, vector<56x128xf32> -> vector<56x128xf32>
    %c0_3 = arith.constant 0 : index
    %c0_4 = arith.constant 0 : index
    %3 = vector.load %arg5[%c0_3, %c0_4] : memref<1x128xf32, #tpu.memory_space<vmem>>, vector<1x128xf32>
    %4 = vector.broadcast %3 : vector<1x128xf32> to vector<56x128xf32>
    %5 = arith.addf %2, %4 : vector<56x128xf32>
    %c0_5 = arith.constant 0 : index
    %c0_6 = arith.constant 0 : index
    %6 = vector.load %arg1[%c0_5, %c0_6] : memref<8x1xi32, #tpu.memory_space<vmem>>, vector<8x1xi32>
    %c1_i32 = arith.constant 1 : i32
    %7 = vector.broadcast %c1_i32 : i32 to vector<8x1xi32>
    %8 = arith.subi %6, %7 : vector<8x1xi32>
    %c0_7 = arith.constant 0 : index
    %c0_8 = arith.constant 0 : index
    %9 = vector.load %arg4[%c0_7, %c0_8] : memref<32x128xf32, #tpu.memory_space<vmem>>, vector<32x128xf32>
    %c0_9 = arith.constant 0 : index
    %c0_10 = arith.constant 0 : index
    %10 = vector.load %arg6[%c0_9, %c0_10] : memref<8x32xf32, #tpu.memory_space<vmem>>, vector<8x32xf32>
    %c0_11 = arith.constant 0 : index
    %c0_12 = arith.constant 0 : index
    %11 = vector.load %arg7[%c0_11, %c0_12] : memref<8x32xf32, #tpu.memory_space<vmem>>, vector<8x32xf32>
    %cst_13 = arith.constant 0.000000e+00 : f32
    %12 = vector.broadcast %cst_13 : f32 to vector<8x32xf32>
    %13 = vector.extract_strided_slice %5 {offsets = [0, 0], sizes = [8, 128], strides = [1, 1]} : vector<56x128xf32> to vector<8x128xf32>
    %cst_14 = arith.constant dense<0.000000e+00> : vector<8x128xf32>
    %14 = tpu.matmul %10, %9, %cst_14 {dimension_numbers = #tpu.dot_dimension_numbers<[1], [0], [0], [1], [0, 0, 1, 1], [], []>} : vector<8x32xf32>, vector<32x128xf32>, vector<8x128xf32> -> vector<8x128xf32>
    %15 = arith.addf %13, %14 : vector<8x128xf32>
    %16 = arith.negf %15 : vector<8x128xf32>
    %17 = math.exp %16 : vector<8x128xf32>
    %cst_15 = arith.constant 1.000000e+00 : f32
    %18 = vector.broadcast %cst_15 : f32 to vector<8x128xf32>
    %19 = arith.addf %18, %17 : vector<8x128xf32>
    %20 = arith.divf %18, %19 : vector<8x128xf32>
    %21 = math.tanh %15 : vector<8x128xf32>
    %22 = vector.extract_strided_slice %20 {offsets = [0, 0], sizes = [8, 32], strides = [1, 1]} : vector<8x128xf32> to vector<8x32xf32>
    %23 = vector.extract_strided_slice %20 {offsets = [0, 32], sizes = [8, 32], strides = [1, 1]} : vector<8x128xf32> to vector<8x32xf32>
    %24 = vector.extract_strided_slice %21 {offsets = [0, 64], sizes = [8, 32], strides = [1, 1]} : vector<8x128xf32> to vector<8x32xf32>
    %25 = vector.extract_strided_slice %20 {offsets = [0, 96], sizes = [8, 32], strides = [1, 1]} : vector<8x128xf32> to vector<8x32xf32>
    %26 = arith.mulf %23, %11 : vector<8x32xf32>
    %27 = arith.mulf %22, %24 : vector<8x32xf32>
    %28 = arith.addf %26, %27 : vector<8x32xf32>
    %29 = math.tanh %28 : vector<8x32xf32>
    %30 = arith.mulf %25, %29 : vector<8x32xf32>
    %c0_i32 = arith.constant 0 : i32
    %31 = vector.broadcast %c0_i32 : i32 to vector<8x1xi32>
    %32 = arith.cmpi eq, %8, %31 : vector<8x1xi32>
    %33 = vector.shape_cast %32 : vector<8x1xi1> to vector<8x1xi1>
    %34 = vector.broadcast %33 : vector<8x1xi1> to vector<8x32xi1>
    %35 = arith.select %34, %30, %12 : vector<8x32xi1>, vector<8x32xf32>
    %36 = vector.extract_strided_slice %5 {offsets = [8, 0], sizes = [8, 128], strides = [1, 1]} : vector<56x128xf32> to vector<8x128xf32>
    %cst_16 = arith.constant dense<0.000000e+00> : vector<8x128xf32>
    %37 = tpu.matmul %30, %9, %cst_16 {dimension_numbers = #tpu.dot_dimension_numbers<[1], [0], [0], [1], [0, 0, 1, 1], [], []>} : vector<8x32xf32>, vector<32x128xf32>, vector<8x128xf32> -> vector<8x128xf32>
    %38 = arith.addf %36, %37 : vector<8x128xf32>
    %39 = arith.negf %38 : vector<8x128xf32>
    %40 = math.exp %39 : vector<8x128xf32>
    %cst_17 = arith.constant 1.000000e+00 : f32
    %41 = vector.broadcast %cst_17 : f32 to vector<8x128xf32>
    %42 = arith.addf %41, %40 : vector<8x128xf32>
    %43 = arith.divf %41, %42 : vector<8x128xf32>
    %44 = math.tanh %38 : vector<8x128xf32>
    %45 = vector.extract_strided_slice %43 {offsets = [0, 0], sizes = [8, 32], strides = [1, 1]} : vector<8x128xf32> to vector<8x32xf32>
    %46 = vector.extract_strided_slice %43 {offsets = [0, 32], sizes = [8, 32], strides = [1, 1]} : vector<8x128xf32> to vector<8x32xf32>
    %47 = vector.extract_strided_slice %44 {offsets = [0, 64], sizes = [8, 32], strides = [1, 1]} : vector<8x128xf32> to vector<8x32xf32>
    %48 = vector.extract_strided_slice %43 {offsets = [0, 96], sizes = [8, 32], strides = [1, 1]} : vector<8x128xf32> to vector<8x32xf32>
    %49 = arith.mulf %46, %28 : vector<8x32xf32>
    %50 = arith.mulf %45, %47 : vector<8x32xf32>
    %51 = arith.addf %49, %50 : vector<8x32xf32>
    %52 = math.tanh %51 : vector<8x32xf32>
    %53 = arith.mulf %48, %52 : vector<8x32xf32>
    %c1_i32_18 = arith.constant 1 : i32
    %54 = vector.broadcast %c1_i32_18 : i32 to vector<8x1xi32>
    %55 = arith.cmpi eq, %8, %54 : vector<8x1xi32>
    %56 = vector.shape_cast %55 : vector<8x1xi1> to vector<8x1xi1>
    %57 = vector.broadcast %56 : vector<8x1xi1> to vector<8x32xi1>
    %58 = arith.select %57, %53, %35 : vector<8x32xi1>, vector<8x32xf32>
    %59 = vector.extract_strided_slice %5 {offsets = [16, 0], sizes = [8, 128], strides = [1, 1]} : vector<56x128xf32> to vector<8x128xf32>
    %cst_19 = arith.constant dense<0.000000e+00> : vector<8x128xf32>
    %60 = tpu.matmul %53, %9, %cst_19 {dimension_numbers = #tpu.dot_dimension_numbers<[1], [0], [0], [1], [0, 0, 1, 1], [], []>} : vector<8x32xf32>, vector<32x128xf32>, vector<8x128xf32> -> vector<8x128xf32>
    %61 = arith.addf %59, %60 : vector<8x128xf32>
    %62 = arith.negf %61 : vector<8x128xf32>
    %63 = math.exp %62 : vector<8x128xf32>
    %cst_20 = arith.constant 1.000000e+00 : f32
    %64 = vector.broadcast %cst_20 : f32 to vector<8x128xf32>
    %65 = arith.addf %64, %63 : vector<8x128xf32>
    %66 = arith.divf %64, %65 : vector<8x128xf32>
    %67 = math.tanh %61 : vector<8x128xf32>
    %68 = vector.extract_strided_slice %66 {offsets = [0, 0], sizes = [8, 32], strides = [1, 1]} : vector<8x128xf32> to vector<8x32xf32>
    %69 = vector.extract_strided_slice %66 {offsets = [0, 32], sizes = [8, 32], strides = [1, 1]} : vector<8x128xf32> to vector<8x32xf32>
    %70 = vector.extract_strided_slice %67 {offsets = [0, 64], sizes = [8, 32], strides = [1, 1]} : vector<8x128xf32> to vector<8x32xf32>
    %71 = vector.extract_strided_slice %66 {offsets = [0, 96], sizes = [8, 32], strides = [1, 1]} : vector<8x128xf32> to vector<8x32xf32>
    %72 = arith.mulf %69, %51 : vector<8x32xf32>
    %73 = arith.mulf %68, %70 : vector<8x32xf32>
    %74 = arith.addf %72, %73 : vector<8x32xf32>
    %75 = math.tanh %74 : vector<8x32xf32>
    %76 = arith.mulf %71, %75 : vector<8x32xf32>
    %c2_i32 = arith.constant 2 : i32
    %77 = vector.broadcast %c2_i32 : i32 to vector<8x1xi32>
    %78 = arith.cmpi eq, %8, %77 : vector<8x1xi32>
    %79 = vector.shape_cast %78 : vector<8x1xi1> to vector<8x1xi1>
    %80 = vector.broadcast %79 : vector<8x1xi1> to vector<8x32xi1>
    %81 = arith.select %80, %76, %58 : vector<8x32xi1>, vector<8x32xf32>
    %82 = vector.extract_strided_slice %5 {offsets = [24, 0], sizes = [8, 128], strides = [1, 1]} : vector<56x128xf32> to vector<8x128xf32>
    %cst_21 = arith.constant dense<0.000000e+00> : vector<8x128xf32>
    %83 = tpu.matmul %76, %9, %cst_21 {dimension_numbers = #tpu.dot_dimension_numbers<[1], [0], [0], [1], [0, 0, 1, 1], [], []>} : vector<8x32xf32>, vector<32x128xf32>, vector<8x128xf32> -> vector<8x128xf32>
    %84 = arith.addf %82, %83 : vector<8x128xf32>
    %85 = arith.negf %84 : vector<8x128xf32>
    %86 = math.exp %85 : vector<8x128xf32>
    %cst_22 = arith.constant 1.000000e+00 : f32
    %87 = vector.broadcast %cst_22 : f32 to vector<8x128xf32>
    %88 = arith.addf %87, %86 : vector<8x128xf32>
    %89 = arith.divf %87, %88 : vector<8x128xf32>
    %90 = math.tanh %84 : vector<8x128xf32>
    %91 = vector.extract_strided_slice %89 {offsets = [0, 0], sizes = [8, 32], strides = [1, 1]} : vector<8x128xf32> to vector<8x32xf32>
    %92 = vector.extract_strided_slice %89 {offsets = [0, 32], sizes = [8, 32], strides = [1, 1]} : vector<8x128xf32> to vector<8x32xf32>
    %93 = vector.extract_strided_slice %90 {offsets = [0, 64], sizes = [8, 32], strides = [1, 1]} : vector<8x128xf32> to vector<8x32xf32>
    %94 = vector.extract_strided_slice %89 {offsets = [0, 96], sizes = [8, 32], strides = [1, 1]} : vector<8x128xf32> to vector<8x32xf32>
    %95 = arith.mulf %92, %74 : vector<8x32xf32>
    %96 = arith.mulf %91, %93 : vector<8x32xf32>
    %97 = arith.addf %95, %96 : vector<8x32xf32>
    %98 = math.tanh %97 : vector<8x32xf32>
    %99 = arith.mulf %94, %98 : vector<8x32xf32>
    %c3_i32 = arith.constant 3 : i32
    %100 = vector.broadcast %c3_i32 : i32 to vector<8x1xi32>
    %101 = arith.cmpi eq, %8, %100 : vector<8x1xi32>
    %102 = vector.shape_cast %101 : vector<8x1xi1> to vector<8x1xi1>
    %103 = vector.broadcast %102 : vector<8x1xi1> to vector<8x32xi1>
    %104 = arith.select %103, %99, %81 : vector<8x32xi1>, vector<8x32xf32>
    %105 = vector.extract_strided_slice %5 {offsets = [32, 0], sizes = [8, 128], strides = [1, 1]} : vector<56x128xf32> to vector<8x128xf32>
    %cst_23 = arith.constant dense<0.000000e+00> : vector<8x128xf32>
    %106 = tpu.matmul %99, %9, %cst_23 {dimension_numbers = #tpu.dot_dimension_numbers<[1], [0], [0], [1], [0, 0, 1, 1], [], []>} : vector<8x32xf32>, vector<32x128xf32>, vector<8x128xf32> -> vector<8x128xf32>
    %107 = arith.addf %105, %106 : vector<8x128xf32>
    %108 = arith.negf %107 : vector<8x128xf32>
    %109 = math.exp %108 : vector<8x128xf32>
    %cst_24 = arith.constant 1.000000e+00 : f32
    %110 = vector.broadcast %cst_24 : f32 to vector<8x128xf32>
    %111 = arith.addf %110, %109 : vector<8x128xf32>
    %112 = arith.divf %110, %111 : vector<8x128xf32>
    %113 = math.tanh %107 : vector<8x128xf32>
    %114 = vector.extract_strided_slice %112 {offsets = [0, 0], sizes = [8, 32], strides = [1, 1]} : vector<8x128xf32> to vector<8x32xf32>
    %115 = vector.extract_strided_slice %112 {offsets = [0, 32], sizes = [8, 32], strides = [1, 1]} : vector<8x128xf32> to vector<8x32xf32>
    %116 = vector.extract_strided_slice %113 {offsets = [0, 64], sizes = [8, 32], strides = [1, 1]} : vector<8x128xf32> to vector<8x32xf32>
    %117 = vector.extract_strided_slice %112 {offsets = [0, 96], sizes = [8, 32], strides = [1, 1]} : vector<8x128xf32> to vector<8x32xf32>
    %118 = arith.mulf %115, %97 : vector<8x32xf32>
    %119 = arith.mulf %114, %116 : vector<8x32xf32>
    %120 = arith.addf %118, %119 : vector<8x32xf32>
    %121 = math.tanh %120 : vector<8x32xf32>
    %122 = arith.mulf %117, %121 : vector<8x32xf32>
    %c4_i32 = arith.constant 4 : i32
    %123 = vector.broadcast %c4_i32 : i32 to vector<8x1xi32>
    %124 = arith.cmpi eq, %8, %123 : vector<8x1xi32>
    %125 = vector.shape_cast %124 : vector<8x1xi1> to vector<8x1xi1>
    %126 = vector.broadcast %125 : vector<8x1xi1> to vector<8x32xi1>
    %127 = arith.select %126, %122, %104 : vector<8x32xi1>, vector<8x32xf32>
    %128 = vector.extract_strided_slice %5 {offsets = [40, 0], sizes = [8, 128], strides = [1, 1]} : vector<56x128xf32> to vector<8x128xf32>
    %cst_25 = arith.constant dense<0.000000e+00> : vector<8x128xf32>
    %129 = tpu.matmul %122, %9, %cst_25 {dimension_numbers = #tpu.dot_dimension_numbers<[1], [0], [0], [1], [0, 0, 1, 1], [], []>} : vector<8x32xf32>, vector<32x128xf32>, vector<8x128xf32> -> vector<8x128xf32>
    %130 = arith.addf %128, %129 : vector<8x128xf32>
    %131 = arith.negf %130 : vector<8x128xf32>
    %132 = math.exp %131 : vector<8x128xf32>
    %cst_26 = arith.constant 1.000000e+00 : f32
    %133 = vector.broadcast %cst_26 : f32 to vector<8x128xf32>
    %134 = arith.addf %133, %132 : vector<8x128xf32>
    %135 = arith.divf %133, %134 : vector<8x128xf32>
    %136 = math.tanh %130 : vector<8x128xf32>
    %137 = vector.extract_strided_slice %135 {offsets = [0, 0], sizes = [8, 32], strides = [1, 1]} : vector<8x128xf32> to vector<8x32xf32>
    %138 = vector.extract_strided_slice %135 {offsets = [0, 32], sizes = [8, 32], strides = [1, 1]} : vector<8x128xf32> to vector<8x32xf32>
    %139 = vector.extract_strided_slice %136 {offsets = [0, 64], sizes = [8, 32], strides = [1, 1]} : vector<8x128xf32> to vector<8x32xf32>
    %140 = vector.extract_strided_slice %135 {offsets = [0, 96], sizes = [8, 32], strides = [1, 1]} : vector<8x128xf32> to vector<8x32xf32>
    %141 = arith.mulf %138, %120 : vector<8x32xf32>
    %142 = arith.mulf %137, %139 : vector<8x32xf32>
    %143 = arith.addf %141, %142 : vector<8x32xf32>
    %144 = math.tanh %143 : vector<8x32xf32>
    %145 = arith.mulf %140, %144 : vector<8x32xf32>
    %c5_i32 = arith.constant 5 : i32
    %146 = vector.broadcast %c5_i32 : i32 to vector<8x1xi32>
    %147 = arith.cmpi eq, %8, %146 : vector<8x1xi32>
    %148 = vector.shape_cast %147 : vector<8x1xi1> to vector<8x1xi1>
    %149 = vector.broadcast %148 : vector<8x1xi1> to vector<8x32xi1>
    %150 = arith.select %149, %145, %127 : vector<8x32xi1>, vector<8x32xf32>
    %151 = vector.extract_strided_slice %5 {offsets = [48, 0], sizes = [8, 128], strides = [1, 1]} : vector<56x128xf32> to vector<8x128xf32>
    %cst_27 = arith.constant dense<0.000000e+00> : vector<8x128xf32>
    %152 = tpu.matmul %145, %9, %cst_27 {dimension_numbers = #tpu.dot_dimension_numbers<[1], [0], [0], [1], [0, 0, 1, 1], [], []>} : vector<8x32xf32>, vector<32x128xf32>, vector<8x128xf32> -> vector<8x128xf32>
    %153 = arith.addf %151, %152 : vector<8x128xf32>
    %154 = arith.negf %153 : vector<8x128xf32>
    %155 = math.exp %154 : vector<8x128xf32>
    %cst_28 = arith.constant 1.000000e+00 : f32
    %156 = vector.broadcast %cst_28 : f32 to vector<8x128xf32>
    %157 = arith.addf %156, %155 : vector<8x128xf32>
    %158 = arith.divf %156, %157 : vector<8x128xf32>
    %159 = math.tanh %153 : vector<8x128xf32>
    %160 = vector.extract_strided_slice %158 {offsets = [0, 0], sizes = [8, 32], strides = [1, 1]} : vector<8x128xf32> to vector<8x32xf32>
    %161 = vector.extract_strided_slice %158 {offsets = [0, 32], sizes = [8, 32], strides = [1, 1]} : vector<8x128xf32> to vector<8x32xf32>
    %162 = vector.extract_strided_slice %159 {offsets = [0, 64], sizes = [8, 32], strides = [1, 1]} : vector<8x128xf32> to vector<8x32xf32>
    %163 = vector.extract_strided_slice %158 {offsets = [0, 96], sizes = [8, 32], strides = [1, 1]} : vector<8x128xf32> to vector<8x32xf32>
    %164 = arith.mulf %161, %143 : vector<8x32xf32>
    %165 = arith.mulf %160, %162 : vector<8x32xf32>
    %166 = arith.addf %164, %165 : vector<8x32xf32>
    %167 = math.tanh %166 : vector<8x32xf32>
    %168 = arith.mulf %163, %167 : vector<8x32xf32>
    %c6_i32 = arith.constant 6 : i32
    %169 = vector.broadcast %c6_i32 : i32 to vector<8x1xi32>
    %170 = arith.cmpi eq, %8, %169 : vector<8x1xi32>
    %171 = vector.shape_cast %170 : vector<8x1xi1> to vector<8x1xi1>
    %172 = vector.broadcast %171 : vector<8x1xi1> to vector<8x32xi1>
    %173 = arith.select %172, %168, %150 : vector<8x32xi1>, vector<8x32xf32>
    %c0_29 = arith.constant 0 : index
    %c0_30 = arith.constant 0 : index
    %174 = vector.load %arg8[%c0_29, %c0_30] : memref<32x64xf32, #tpu.memory_space<vmem>>, vector<32x64xf32>
    %cst_31 = arith.constant dense<0.000000e+00> : vector<8x64xf32>
    %175 = tpu.matmul %173, %174, %cst_31 {dimension_numbers = #tpu.dot_dimension_numbers<[1], [0], [0], [1], [0, 0, 1, 1], [], []>} : vector<8x32xf32>, vector<32x64xf32>, vector<8x64xf32> -> vector<8x64xf32>
    %c0_32 = arith.constant 0 : index
    %c0_33 = arith.constant 0 : index
    %176 = vector.load %arg2[%c0_32, %c0_33] : memref<8x32xf32, #tpu.memory_space<vmem>>, vector<8x32xf32>
    %c0_34 = arith.constant 0 : index
    %c0_35 = arith.constant 0 : index
    %177 = vector.load %arg9[%c0_34, %c0_35] : memref<32x64xf32, #tpu.memory_space<vmem>>, vector<32x64xf32>
    %cst_36 = arith.constant dense<0.000000e+00> : vector<8x64xf32>
    %178 = tpu.matmul %176, %177, %cst_36 {dimension_numbers = #tpu.dot_dimension_numbers<[1], [0], [0], [1], [0, 0, 1, 1], [], []>} : vector<8x32xf32>, vector<32x64xf32>, vector<8x64xf32> -> vector<8x64xf32>
    %179 = arith.addf %175, %178 : vector<8x64xf32>
    %c0_37 = arith.constant 0 : index
    %c0_38 = arith.constant 0 : index
    %180 = vector.load %arg10[%c0_37, %c0_38] : memref<1x64xf32, #tpu.memory_space<vmem>>, vector<1x64xf32>
    %181 = vector.broadcast %180 : vector<1x64xf32> to vector<8x64xf32>
    %182 = arith.addf %179, %181 : vector<8x64xf32>
    %cst_39 = arith.constant 0.000000e+00 : f32
    %183 = vector.broadcast %cst_39 : f32 to vector<8x64xf32>
    %184 = arith.maximumf %182, %183 : vector<8x64xf32>
    %c0_40 = arith.constant 0 : index
    %c0_41 = arith.constant 0 : index
    %185 = vector.load %arg11[%c0_40, %c0_41] : memref<64x8xf32, #tpu.memory_space<vmem>>, vector<64x8xf32>
    %cst_42 = arith.constant dense<0.000000e+00> : vector<8x8xf32>
    %186 = tpu.matmul %184, %185, %cst_42 {dimension_numbers = #tpu.dot_dimension_numbers<[1], [0], [0], [1], [0, 0, 1, 1], [], []>} : vector<8x64xf32>, vector<64x8xf32>, vector<8x8xf32> -> vector<8x8xf32>
    %c0_43 = arith.constant 0 : index
    %c0_44 = arith.constant 0 : index
    %187 = vector.load %arg12[%c0_43, %c0_44] : memref<1x8xf32, #tpu.memory_space<vmem>>, vector<1x8xf32>
    %188 = vector.broadcast %187 : vector<1x8xf32> to vector<8x8xf32>
    %189 = arith.addf %186, %188 : vector<8x8xf32>
    %190 = arith.negf %189 : vector<8x8xf32>
    %191 = math.exp %190 : vector<8x8xf32>
    %cst_45 = arith.constant 1.000000e+00 : f32
    %192 = vector.broadcast %cst_45 : f32 to vector<8x8xf32>
    %193 = arith.addf %192, %191 : vector<8x8xf32>
    %194 = arith.divf %192, %193 : vector<8x8xf32>
    %c0_46 = arith.constant 0 : index
    %c0_47 = arith.constant 0 : index
    %195 = vector.load %arg13[%c0_46, %c0_47] : memref<8x8xf32, #tpu.memory_space<vmem>>, vector<8x8xf32>
    tpu.vector_store %arg13[%c0_46, %c0_47], %194 {strides = array<i32>} : memref<8x8xf32, #tpu.memory_space<vmem>>, vector<8x8xf32>,
    return
  }
}

</mosaic_0001>

<llo_original>
// kernel: tpu_custom_call.1
$region0: #{tpu_custom_call.1}
  #allocation0 [shape = 'u32[]', space=smem, size = 0x4, offset = 0x4, fixed_abs, tag = 'smem constant byte address 0x4 - core index']
  #allocation1 [shape = 'u32[72,128]{1,0:T(1,128)}', space=vmem, size = 0x9000, scoped, tag = 'internal scratch']
  %s0 = inlined_call_operand.vmem [shape: f32[56,32], index: 0, kind: input, shape index: {}]
  %s1 = inlined_call_operand.vmem [shape: s32[8,1], index: 1, kind: input, shape index: {}]
  %s2 = inlined_call_operand.vmem [shape: f32[8,32], index: 2, kind: input, shape index: {}]
  %s3 = inlined_call_operand.vmem [shape: f32[32,128], index: 3, kind: input, shape index: {}]
  %s4 = inlined_call_operand.vmem [shape: f32[32,128], index: 4, kind: input, shape index: {}]
  %s5 = inlined_call_operand.vmem [shape: f32[1,128], index: 5, kind: input, shape index: {}]
  %s6 = inlined_call_operand.vmem [shape: f32[8,32], index: 6, kind: input, shape index: {}]
  %s7 = inlined_call_operand.vmem [shape: f32[8,32], index: 7, kind: input, shape index: {}]
  %s8 = inlined_call_operand.vmem [shape: f32[32,64], index: 8, kind: input, shape index: {}]
  %s9 = inlined_call_operand.vmem [shape: f32[32,64], index: 9, kind: input, shape index: {}]
  %s10 = inlined_call_operand.vmem [shape: f32[1,64], index: 10, kind: input, shape index: {}]
  %s11 = inlined_call_operand.vmem [shape: f32[64,8], index: 11, kind: input, shape index: {}]
  %s12 = inlined_call_operand.vmem [shape: f32[1,8], index: 12, kind: input, shape index: {}]
  %s13 = inlined_call_operand.hbm [shape: f32[8,8], index: 13, kind: output, shape index: {}]
  %s14 = sld [smem:[#allocation0]]
  $region62: #{tpu_custom_call.1} parent=0
    _
  %s16 = ssub.s32 1, %s14
  %s17 = scalar_select 0, %s16, %s14
  $region1: #{tpu_custom_call.1} parent=0
    #allocation2 [shape = 'u8[4096]{0}', space=vmem, size = 0x1000, scoped, tag = 'output window, operand 0, single buffered']
    #allocation3 [shape = 's32[1]{0}', space=sflag, size = 0x4, scoped, tag = 'scoped memory for tpu_custom_call.1']
    %18 = vsyncpa [#allocation3], 0
    // Predicated region
    $region2: #{tpu_custom_call.1} parent=1 // pred_check
      _
    $region3: #{tpu_custom_call.1} parent=1 // pred_check_branch
      %20 = sbr.rel (0) target = $region5
    $region4: #{tpu_custom_call.1} parent=1 // pred_region
      _
    $region5: #{tpu_custom_call.1} parent=1 // pred_fallthru
      _
    // Predicated region
    $region6: #{tpu_custom_call.1} parent=1 // pred_check
      _
    $region7: #{tpu_custom_call.1} parent=1 // pred_check_branch
      %22 = sbr.rel (0) target = $region9
    $region8: #{tpu_custom_call.1} parent=1 // pred_region
      _
    $region9: #{tpu_custom_call.1} parent=1 // pred_fallthru
      _
    // Predicated region
    $region10: #{tpu_custom_call.1} parent=1 // pred_check
      _
    $region11: #{tpu_custom_call.1} parent=1 // pred_check_branch
      %24 = sbr.rel (0) target = $region13
    $region12: #{tpu_custom_call.1} parent=1 // pred_region
      _
    $region13: #{tpu_custom_call.1} parent=1 // pred_fallthru
      _
    // Predicated region
    $region14: #{tpu_custom_call.1} parent=1 // pred_check
      _
    $region15: #{tpu_custom_call.1} parent=1 // pred_check_branch
      %26 = sbr.rel (0) target = $region17
    $region16: #{tpu_custom_call.1} parent=1 // pred_region
      _
    $region17: #{tpu_custom_call.1} parent=1 // pred_fallthru
      _
    // Predicated region
    $region18: #{tpu_custom_call.1} parent=1 // pred_check
      _
    $region19: #{tpu_custom_call.1} parent=1 // pred_check_branch
      %28 = sbr.rel (0) target = $region21
    $region20: #{tpu_custom_call.1} parent=1 // pred_region
      _
    $region21: #{tpu_custom_call.1} parent=1 // pred_fallthru
      _
    // Predicated region
    $region22: #{tpu_custom_call.1} parent=1 // pred_check
      _
    $region23: #{tpu_custom_call.1} parent=1 // pred_check_branch
      %30 = sbr.rel (0) target = $region25
    $region24: #{tpu_custom_call.1} parent=1 // pred_region
      _
    $region25: #{tpu_custom_call.1} parent=1 // pred_fallthru
      _
    // Predicated region
    $region26: #{tpu_custom_call.1} parent=1 // pred_check
      _
    $region27: #{tpu_custom_call.1} parent=1 // pred_check_branch
      %32 = sbr.rel (0) target = $region29
    $region28: #{tpu_custom_call.1} parent=1 // pred_region
      _
    $region29: #{tpu_custom_call.1} parent=1 // pred_fallthru
      _
    // Predicated region
    $region30: #{tpu_custom_call.1} parent=1 // pred_check
      _
    $region31: #{tpu_custom_call.1} parent=1 // pred_check_branch
      %34 = sbr.rel (0) target = $region33
    $region32: #{tpu_custom_call.1} parent=1 // pred_region
      _
    $region33: #{tpu_custom_call.1} parent=1 // pred_fallthru
      _
    // Predicated region
    $region34: #{tpu_custom_call.1} parent=1 // pred_check
      _
    $region35: #{tpu_custom_call.1} parent=1 // pred_check_branch
      %36 = sbr.rel (0) target = $region37
    $region36: #{tpu_custom_call.1} parent=1 // pred_region
      _
    $region37: #{tpu_custom_call.1} parent=1 // pred_fallthru
      _
    // Predicated region
    $region38: #{tpu_custom_call.1} parent=1 // pred_check
      _
    $region39: #{tpu_custom_call.1} parent=1 // pred_check_branch
      %38 = sbr.rel (0) target = $region41
    $region40: #{tpu_custom_call.1} parent=1 // pred_region
      _
    $region41: #{tpu_custom_call.1} parent=1 // pred_fallthru
      _
    // Predicated region
    $region42: #{tpu_custom_call.1} parent=1 // pred_check
      _
    $region43: #{tpu_custom_call.1} parent=1 // pred_check_branch
      %40 = sbr.rel (0) target = $region45
    $region44: #{tpu_custom_call.1} parent=1 // pred_region
      _
    $region45: #{tpu_custom_call.1} parent=1 // pred_fallthru
      _
    // Predicated region
    $region46: #{tpu_custom_call.1} parent=1 // pred_check
      _
    $region47: #{tpu_custom_call.1} parent=1 // pred_check_branch
      %42 = sbr.rel (0) target = $region49
    $region48: #{tpu_custom_call.1} parent=1 // pred_region
      _
    $region49: #{tpu_custom_call.1} parent=1 // pred_fallthru
      _
    // Predicated region
    $region50: #{tpu_custom_call.1} parent=1 // pred_check
      _
    $region51: #{tpu_custom_call.1} parent=1 // pred_check_branch
      %44 = sbr.rel (0) target = $region53
    $region52: #{tpu_custom_call.1} parent=1 // pred_region
      _
    $region53: #{tpu_custom_call.1} parent=1 // pred_fallthru
      _
    %v45 = vld [vmem:[%s0] sm:$0xff]
    %v46 = vld [vmem:[%s0 + $0x8] sm:$0xff]
    %v47 = vld [vmem:[%s0 + $0x10] sm:$0xff]
    %v48 = vld [vmem:[%s0 + $0x18] sm:$0xff]
    %v49 = vld [vmem:[%s0 + $0x20] sm:$0xff]
    %v50 = vld [vmem:[%s0 + $0x28] sm:$0xff]
    %v51 = vld [vmem:[%s0 + $0x30] sm:$0xff]
    %v52 = vld [vmem:[%s3] sm:$0xff]
    %v53 = vld [vmem:[%s3 + $0x8] sm:$0xff]
    %v54 = vld [vmem:[%s3 + $0x10] sm:$0xff]
    %v55 = vld [vmem:[%s3 + $0x18] sm:$0xff]
    %v56 = vld [vmem:[%s5] sm:$0x1]
    %v58 = vperm.slane %v56, 0
    %vm60 = vcmask 261120
    %v62 = vsel %vm60, %v45, 0
    %v65 = vsel %vm60, %v46, 0
    %v68 = vsel %vm60, %v47, 0
    %v71 = vsel %vm60, %v48, 0
    %v74 = vsel %vm60, %v49, 0
    %v77 = vsel %vm60, %v50, 0
    %v80 = vsel %vm60, %v51, 0
    %82 = vmatpush.msra.mxu0 0.0
    %83 = vmatpush.msra.mxu0 0.0
    %84 = vmatpush.msra.mxu0 0.0
    %85 = vmatpush.msra.mxu0 0.0
    %86 = vmatpush.msra.mxu0 0.0
    %87 = vmatpush.msra.mxu0 0.0
    %88 = vmatpush.msra.mxu0 0.0
    %89 = vmatpush.msra.mxu0 0.0
    %90 = vmatpush.msra.mxu0 0.0
    %91 = vmatpush.msra.mxu0 0.0
    %92 = vmatpush.msra.mxu0 0.0
    %93 = vmatpush.msra.mxu0 0.0
    %94 = vmatpush.msra.mxu0 %v55
    %95 = vmatpush.msra.mxu0 %v54
    %96 = vmatpush.msra.mxu0 %v53
    %97 = vmatpush.msra.mxu0 %v52
    %98 = vmatmul.f32.gmra.mxu0 %v62
    %v99 = vpop.f32.mrf.mxu0
    %v100 = vadd.f32 %v58, %v99
    %101 = vmatmul.f32.gmra.mxu0 %v65
    %v102 = vpop.f32.mrf.mxu0
    %v103 = vadd.f32 %v58, %v102
    %104 = vmatmul.f32.gmra.mxu0 %v68
    %v105 = vpop.f32.mrf.mxu0
    %v106 = vadd.f32 %v58, %v105
    %107 = vmatmul.f32.gmra.mxu0 %v71
    %v108 = vpop.f32.mrf.mxu0
    %v109 = vadd.f32 %v58, %v108
    %110 = vmatmul.f32.gmra.mxu0 %v74
    %v111 = vpop.f32.mrf.mxu0
    %v112 = vadd.f32 %v58, %v111
    %113 = vmatmul.f32.gmra.mxu0 %v77
    %v114 = vpop.f32.mrf.mxu0
    %v115 = vadd.f32 %v58, %v114
    %116 = vmatmul.f32.gmra.mxu0 %v80
    %v117 = vpop.f32.mrf.mxu0
    %v118 = vadd.f32 %v58, %v117
    %119 = vdwg.mxu0
    %v120 = vld [vmem:[%s1] sm:$0xff]
    %v121 = vsub.s32 %v120, 1
    %v122 = vld [vmem:[%s4] sm:$0xff]
    %v123 = vld [vmem:[%s4 + $0x8] sm:$0xff]
    %v124 = vld [vmem:[%s4 + $0x10] sm:$0xff]
    %v125 = vld [vmem:[%s4 + $0x18] sm:$0xff]
    %v126 = vld [vmem:[%s6] sm:$0xff]
    %v127 = vld [vmem:[%s7] sm:$0xff]
    %v129 = vsel %vm60, %v126, 0
    %131 = vmatpush.msra.mxu0 0.0
    %132 = vmatpush.msra.mxu0 0.0
    %133 = vmatpush.msra.mxu0 0.0
    %134 = vmatpush.msra.mxu0 0.0
    %135 = vmatpush.msra.mxu0 0.0
    %136 = vmatpush.msra.mxu0 0.0
    %137 = vmatpush.msra.mxu0 0.0
    %138 = vmatpush.msra.mxu0 0.0
    %139 = vmatpush.msra.mxu0 0.0
    %140 = vmatpush.msra.mxu0 0.0
    %141 = vmatpush.msra.mxu0 0.0
    %142 = vmatpush.msra.mxu0 0.0
    %143 = vmatpush.msra.mxu0 %v125
    %144 = vmatpush.msra.mxu0 %v124
    %145 = vmatpush.msra.mxu0 %v123
    %146 = vmatpush.msra.mxu0 %v122
    %147 = vmatmul.f32.gmra.mxu0 %v129
    %v148 = vpop.f32.mrf.mxu0
    %v149 = vadd.f32 0.0, %v148
    %150 = vdwg.mxu0
    %v151 = vadd.f32 %v100, %v149
    %v152 = vxor.u32 %v151, 2147483648
    %v153 = vmul.f32 %v152, 1.442695
    %v154 = vpow.pop %v153
    %v155 = vadd.f32 %v154, 1.0
    %v156 = vrcp.pop %v155
    %v157 = vmul.f32 %v155, %v156
    %v158 = vsub.f32 1.0, %v157
    %v159 = vmul.f32 %v156, %v158
    %v160 = vadd.f32 %v156, %v159
    %vm161 = vweird.f32 %v155
    %vm162 = vweird.f32 %v156
    %vm163 = vmor %vm161, %vm162
    %v164 = vsel %vm163, %v156, %v160
    %v165 = vand.u32 2147483647, %v155
    %vm166 = vcmp.eq.f32.partialorder %v165, 8.507059e+37
    %v167 = vand.u32 %v155, 2147483648
    %v168 = vor.u32 1.1754944e-38, %v167
    %v169 = vsel %vm166, %v168, %v164
    %v170 = vmul.f32 1.0, %v169
    %v171 = vtanh.pop %v151
    %173 = vrot.lane.b32.xlu0 %v127, 32
    %v174 = vpop.permute.xlu0 %173
    %v176 = vmul.f32 %v170, %v174
    %178 = vrot.lane.b32.xlu0 %v171, 64
    %v179 = vpop.permute.xlu0 %178
    %v181 = vmul.f32 %v170, %v179
    %183 = vrot.lane.b32.xlu0 %v181, 32
    %v184 = vpop.permute.xlu0 %183
    %v186 = vadd.f32 %v176, %v184
    %v187 = vtanh.pop %v186
    %189 = vrot.lane.b32.xlu0 %v187, 64
    %v190 = vpop.permute.xlu0 %189
    %v192 = vmul.f32 %v170, %v190
    %vm193 = vcmp.eq.s32.totalorder %v121, 0
    %v194 = vsel %vm193, 1, 0
    %195 = vset.pattern.permute.xlu0 0
    %196 = vperm.xlu0 %195, %v194
    %v197 = vpop.permute.xlu0 %196
    %vm198 = vcmp.eq.s32.totalorder %v197, 1
    %v199 = vsel %vm198, %v192, 0.0
    %201 = vrot.lane.b32.xlu0 %v192, 32
    %v202 = vpop.permute.xlu0 %201
    %v203 = vsel %vm60, %v202, 0
    %205 = vmatpush.msra.mxu0 0.0
    %206 = vmatpush.msra.mxu0 0.0
    %207 = vmatpush.msra.mxu0 0.0
    %208 = vmatpush.msra.mxu0 0.0
    %209 = vmatpush.msra.mxu0 0.0
    %210 = vmatpush.msra.mxu0 0.0
    %211 = vmatpush.msra.mxu0 0.0
    %212 = vmatpush.msra.mxu0 0.0
    %213 = vmatpush.msra.mxu0 0.0
    %214 = vmatpush.msra.mxu0 0.0
    %215 = vmatpush.msra.mxu0 0.0
    %216 = vmatpush.msra.mxu0 0.0
    %217 = vmatpush.msra.mxu0 %v125
    %218 = vmatpush.msra.mxu0 %v124
    %219 = vmatpush.msra.mxu0 %v123
    %220 = vmatpush.msra.mxu0 %v122
    %221 = vmatmul.f32.gmra.mxu0 %v203
    %v222 = vpop.f32.mrf.mxu0
    %v223 = vadd.f32 0.0, %v222
    %224 = vdwg.mxu0
    %v225 = vadd.f32 %v103, %v223
    %v226 = vxor.u32 %v225, 2147483648
    %v227 = vmul.f32 %v226, 1.442695
    %v228 = vpow.pop %v227
    %v229 = vadd.f32 %v228, 1.0
    %v230 = vrcp.pop %v229
    %v231 = vmul.f32 %v229, %v230
    %v232 = vsub.f32 1.0, %v231
    %v233 = vmul.f32 %v230, %v232
    %v234 = vadd.f32 %v230, %v233
    %vm235 = vweird.f32 %v229
    %vm236 = vweird.f32 %v230
    %vm237 = vmor %vm235, %vm236
    %v238 = vsel %vm237, %v230, %v234
    %v239 = vand.u32 2147483647, %v229
    %vm240 = vcmp.eq.f32.partialorder %v239, 8.507059e+37
    %v241 = vand.u32 %v229, 2147483648
    %v242 = vor.u32 1.1754944e-38, %v241
    %v243 = vsel %vm240, %v242, %v238
    %v244 = vmul.f32 1.0, %v243
    %v245 = vtanh.pop %v225
    %v246 = vmul.f32 %v244, %v186
    %248 = vrot.lane.b32.xlu0 %v245, 64
    %v249 = vpop.permute.xlu0 %248
    %v251 = vmul.f32 %v244, %v249
    %253 = vrot.lane.b32.xlu0 %v251, 32
    %v254 = vpop.permute.xlu0 %253
    %v256 = vadd.f32 %v246, %v254
    %v257 = vtanh.pop %v256
    %259 = vrot.lane.b32.xlu0 %v257, 64
    %v260 = vpop.permute.xlu0 %259
    %v262 = vmul.f32 %v244, %v260
    %vm263 = vcmp.eq.s32.totalorder %v121, 1
    %v264 = vsel %vm263, 1, 0
    %265 = vset.pattern.permute.xlu0 0
    %266 = vperm.xlu0 %265, %v264
    %v267 = vpop.permute.xlu0 %266
    %vm268 = vcmp.eq.s32.totalorder %v267, 1
    %v269 = vsel %vm268, %v262, %v199
    %271 = vrot.lane.b32.xlu0 %v262, 32
    %v272 = vpop.permute.xlu0 %271
    %v273 = vsel %vm60, %v272, 0
    %275 = vmatpush.msra.mxu0 0.0
    %276 = vmatpush.msra.mxu0 0.0
    %277 = vmatpush.msra.mxu0 0.0
    %278 = vmatpush.msra.mxu0 0.0
    %279 = vmatpush.msra.mxu0 0.0
    %280 = vmatpush.msra.mxu0 0.0
    %281 = vmatpush.msra.mxu0 0.0
    %282 = vmatpush.msra.mxu0 0.0
    %283 = vmatpush.msra.mxu0 0.0
    %284 = vmatpush.msra.mxu0 0.0
    %285 = vmatpush.msra.mxu0 0.0
    %286 = vmatpush.msra.mxu0 0.0
    %287 = vmatpush.msra.mxu0 %v125
    %288 = vmatpush.msra.mxu0 %v124
    %289 = vmatpush.msra.mxu0 %v123
    %290 = vmatpush.msra.mxu0 %v122
    %291 = vmatmul.f32.gmra.mxu0 %v273
    %v292 = vpop.f32.mrf.mxu0
    %v293 = vadd.f32 0.0, %v292
    %294 = vdwg.mxu0
    %v295 = vadd.f32 %v106, %v293
    %v296 = vxor.u32 %v295, 2147483648
    %v297 = vmul.f32 %v296, 1.442695
    %v298 = vpow.pop %v297
    %v299 = vadd.f32 %v298, 1.0
    %v300 = vrcp.pop %v299
    %v301 = vmul.f32 %v299, %v300
    %v302 = vsub.f32 1.0, %v301
    %v303 = vmul.f32 %v300, %v302
    %v304 = vadd.f32 %v300, %v303
    %vm305 = vweird.f32 %v299
    %vm306 = vweird.f32 %v300
    %vm307 = vmor %vm305, %vm306
    %v308 = vsel %vm307, %v300, %v304
    %v309 = vand.u32 2147483647, %v299
    %vm310 = vcmp.eq.f32.partialorder %v309, 8.507059e+37
    %v311 = vand.u32 %v299, 2147483648
    %v312 = vor.u32 1.1754944e-38, %v311
    %v313 = vsel %vm310, %v312, %v308
    %v314 = vmul.f32 1.0, %v313
    %v315 = vtanh.pop %v295
    %v316 = vmul.f32 %v314, %v256
    %318 = vrot.lane.b32.xlu0 %v315, 64
    %v319 = vpop.permute.xlu0 %318
    %v321 = vmul.f32 %v314, %v319
    %323 = vrot.lane.b32.xlu0 %v321, 32
    %v324 = vpop.permute.xlu0 %323
    %v326 = vadd.f32 %v316, %v324
    %v327 = vtanh.pop %v326
    %329 = vrot.lane.b32.xlu0 %v327, 64
    %v330 = vpop.permute.xlu0 %329
    %v332 = vmul.f32 %v314, %v330
    %vm333 = vcmp.eq.s32.totalorder %v121, 2
    %v334 = vsel %vm333, 1, 0
    %335 = vset.pattern.permute.xlu0 0
    %336 = vperm.xlu0 %335, %v334
    %v337 = vpop.permute.xlu0 %336
    %vm338 = vcmp.eq.s32.totalorder %v337, 1
    %v339 = vsel %vm338, %v332, %v269
    %341 = vrot.lane.b32.xlu0 %v332, 32
    %v342 = vpop.permute.xlu0 %341
    %v343 = vsel %vm60, %v342, 0
    %345 = vmatpush.msra.mxu0 0.0
    %346 = vmatpush.msra.mxu0 0.0
    %347 = vmatpush.msra.mxu0 0.0
    %348 = vmatpush.msra.mxu0 0.0
    %349 = vmatpush.msra.mxu0 0.0
    %350 = vmatpush.msra.mxu0 0.0
    %351 = vmatpush.msra.mxu0 0.0
    %352 = vmatpush.msra.mxu0 0.0
    %353 = vmatpush.msra.mxu0 0.0
    %354 = vmatpush.msra.mxu0 0.0
    %355 = vmatpush.msra.mxu0 0.0
    %356 = vmatpush.msra.mxu0 0.0
    %357 = vmatpush.msra.mxu0 %v125
    %358 = vmatpush.msra.mxu0 %v124
    %359 = vmatpush.msra.mxu0 %v123
    %360 = vmatpush.msra.mxu0 %v122
    %361 = vmatmul.f32.gmra.mxu0 %v343
    %v362 = vpop.f32.mrf.mxu0
    %v363 = vadd.f32 0.0, %v362
    %364 = vdwg.mxu0
    %v365 = vadd.f32 %v109, %v363
    %v366 = vxor.u32 %v365, 2147483648
    %v367 = vmul.f32 %v366, 1.442695
    %v368 = vpow.pop %v367
    %v369 = vadd.f32 %v368, 1.0
    %v370 = vrcp.pop %v369
    %v371 = vmul.f32 %v369, %v370
    %v372 = vsub.f32 1.0, %v371
    %v373 = vmul.f32 %v370, %v372
    %v374 = vadd.f32 %v370, %v373
    %vm375 = vweird.f32 %v369
    %vm376 = vweird.f32 %v370
    %vm377 = vmor %vm375, %vm376
    %v378 = vsel %vm377, %v370, %v374
    %v379 = vand.u32 2147483647, %v369
    %vm380 = vcmp.eq.f32.partialorder %v379, 8.507059e+37
    %v381 = vand.u32 %v369, 2147483648
    %v382 = vor.u32 1.1754944e-38, %v381
    %v383 = vsel %vm380, %v382, %v378
    %v384 = vmul.f32 1.0, %v383
    %v385 = vtanh.pop %v365
    %v386 = vmul.f32 %v384, %v326
    %388 = vrot.lane.b32.xlu0 %v385, 64
    %v389 = vpop.permute.xlu0 %388
    %v391 = vmul.f32 %v384, %v389
    %393 = vrot.lane.b32.xlu0 %v391, 32
    %v394 = vpop.permute.xlu0 %393
    %v396 = vadd.f32 %v386, %v394
    %v397 = vtanh.pop %v396
    %399 = vrot.lane.b32.xlu0 %v397, 64
    %v400 = vpop.permute.xlu0 %399
    %v402 = vmul.f32 %v384, %v400
    %vm403 = vcmp.eq.s32.totalorder %v121, 3
    %v404 = vsel %vm403, 1, 0
    %405 = vset.pattern.permute.xlu0 0
    %406 = vperm.xlu0 %405, %v404
    %v407 = vpop.permute.xlu0 %406
    %vm408 = vcmp.eq.s32.totalorder %v407, 1
    %v409 = vsel %vm408, %v402, %v339
    %411 = vrot.lane.b32.xlu0 %v402, 32
    %v412 = vpop.permute.xlu0 %411
    %v413 = vsel %vm60, %v412, 0
    %415 = vmatpush.msra.mxu0 0.0
    %416 = vmatpush.msra.mxu0 0.0
    %417 = vmatpush.msra.mxu0 0.0
    %418 = vmatpush.msra.mxu0 0.0
    %419 = vmatpush.msra.mxu0 0.0
    %420 = vmatpush.msra.mxu0 0.0
    %421 = vmatpush.msra.mxu0 0.0
    %422 = vmatpush.msra.mxu0 0.0
    %423 = vmatpush.msra.mxu0 0.0
    %424 = vmatpush.msra.mxu0 0.0
    %425 = vmatpush.msra.mxu0 0.0
    %426 = vmatpush.msra.mxu0 0.0
    %427 = vmatpush.msra.mxu0 %v125
    %428 = vmatpush.msra.mxu0 %v124
    %429 = vmatpush.msra.mxu0 %v123
    %430 = vmatpush.msra.mxu0 %v122
    %431 = vmatmul.f32.gmra.mxu0 %v413
    %v432 = vpop.f32.mrf.mxu0
    %v433 = vadd.f32 0.0, %v432
    %434 = vdwg.mxu0
    %v435 = vadd.f32 %v112, %v433
    %v436 = vxor.u32 %v435, 2147483648
    %v437 = vmul.f32 %v436, 1.442695
    %v438 = vpow.pop %v437
    %v439 = vadd.f32 %v438, 1.0
    %v440 = vrcp.pop %v439
    %v441 = vmul.f32 %v439, %v440
    %v442 = vsub.f32 1.0, %v441
    %v443 = vmul.f32 %v440, %v442
    %v444 = vadd.f32 %v440, %v443
    %vm445 = vweird.f32 %v439
    %vm446 = vweird.f32 %v440
    %vm447 = vmor %vm445, %vm446
    %v448 = vsel %vm447, %v440, %v444
    %v449 = vand.u32 2147483647, %v439
    %vm450 = vcmp.eq.f32.partialorder %v449, 8.507059e+37
    %v451 = vand.u32 %v439, 2147483648
    %v452 = vor.u32 1.1754944e-38, %v451
    %v453 = vsel %vm450, %v452, %v448
    %v454 = vmul.f32 1.0, %v453
    %v455 = vtanh.pop %v435
    %v456 = vmul.f32 %v454, %v396
    %458 = vrot.lane.b32.xlu0 %v455, 64
    %v459 = vpop.permute.xlu0 %458
    %v461 = vmul.f32 %v454, %v459
    %463 = vrot.lane.b32.xlu0 %v461, 32
    %v464 = vpop.permute.xlu0 %463
    %v466 = vadd.f32 %v456, %v464
    %v467 = vtanh.pop %v466
    %469 = vrot.lane.b32.xlu0 %v467, 64
    %v470 = vpop.permute.xlu0 %469
    %v472 = vmul.f32 %v454, %v470
    %vm473 = vcmp.eq.s32.totalorder %v121, 4
    %v474 = vsel %vm473, 1, 0
    %475 = vset.pattern.permute.xlu0 0
    %476 = vperm.xlu0 %475, %v474
    %v477 = vpop.permute.xlu0 %476
    %vm478 = vcmp.eq.s32.totalorder %v477, 1
    %v479 = vsel %vm478, %v472, %v409
    %481 = vrot.lane.b32.xlu0 %v472, 32
    %v482 = vpop.permute.xlu0 %481
    %v483 = vsel %vm60, %v482, 0
    %485 = vmatpush.msra.mxu0 0.0
    %486 = vmatpush.msra.mxu0 0.0
    %487 = vmatpush.msra.mxu0 0.0
    %488 = vmatpush.msra.mxu0 0.0
    %489 = vmatpush.msra.mxu0 0.0
    %490 = vmatpush.msra.mxu0 0.0
    %491 = vmatpush.msra.mxu0 0.0
    %492 = vmatpush.msra.mxu0 0.0
    %493 = vmatpush.msra.mxu0 0.0
    %494 = vmatpush.msra.mxu0 0.0
    %495 = vmatpush.msra.mxu0 0.0
    %496 = vmatpush.msra.mxu0 0.0
    %497 = vmatpush.msra.mxu0 %v125
    %498 = vmatpush.msra.mxu0 %v124
    %499 = vmatpush.msra.mxu0 %v123
    %500 = vmatpush.msra.mxu0 %v122
    %501 = vmatmul.f32.gmra.mxu0 %v483
    %v502 = vpop.f32.mrf.mxu0
    %v503 = vadd.f32 0.0, %v502
    %504 = vdwg.mxu0
    %v505 = vadd.f32 %v115, %v503
    %v506 = vxor.u32 %v505, 2147483648
    %v507 = vmul.f32 %v506, 1.442695
    %v508 = vpow.pop %v507
    %v509 = vadd.f32 %v508, 1.0
    %v510 = vrcp.pop %v509
    %v511 = vmul.f32 %v509, %v510
    %v512 = vsub.f32 1.0, %v511
    %v513 = vmul.f32 %v510, %v512
    %v514 = vadd.f32 %v510, %v513
    %vm515 = vweird.f32 %v509
    %vm516 = vweird.f32 %v510
    %vm517 = vmor %vm515, %vm516
    %v518 = vsel %vm517, %v510, %v514
    %v519 = vand.u32 2147483647, %v509
    %vm520 = vcmp.eq.f32.partialorder %v519, 8.507059e+37
    %v521 = vand.u32 %v509, 2147483648
    %v522 = vor.u32 1.1754944e-38, %v521
    %v523 = vsel %vm520, %v522, %v518
    %v524 = vmul.f32 1.0, %v523
    %v525 = vtanh.pop %v505
    %v526 = vmul.f32 %v524, %v466
    %528 = vrot.lane.b32.xlu0 %v525, 64
    %v529 = vpop.permute.xlu0 %528
    %v531 = vmul.f32 %v524, %v529
    %533 = vrot.lane.b32.xlu0 %v531, 32
    %v534 = vpop.permute.xlu0 %533
    %v536 = vadd.f32 %v526, %v534
    %v537 = vtanh.pop %v536
    %539 = vrot.lane.b32.xlu0 %v537, 64
    %v540 = vpop.permute.xlu0 %539
    %v542 = vmul.f32 %v524, %v540
    %vm543 = vcmp.eq.s32.totalorder %v121, 5
    %v544 = vsel %vm543, 1, 0
    %545 = vset.pattern.permute.xlu0 0
    %546 = vperm.xlu0 %545, %v544
    %v547 = vpop.permute.xlu0 %546
    %vm548 = vcmp.eq.s32.totalorder %v547, 1
    %v549 = vsel %vm548, %v542, %v479
    %551 = vrot.lane.b32.xlu0 %v542, 32
    %v552 = vpop.permute.xlu0 %551
    %v553 = vsel %vm60, %v552, 0
    %555 = vmatpush.msra.mxu0 0.0
    %556 = vmatpush.msra.mxu0 0.0
    %557 = vmatpush.msra.mxu0 0.0
    %558 = vmatpush.msra.mxu0 0.0
    %559 = vmatpush.msra.mxu0 0.0
    %560 = vmatpush.msra.mxu0 0.0
    %561 = vmatpush.msra.mxu0 0.0
    %562 = vmatpush.msra.mxu0 0.0
    %563 = vmatpush.msra.mxu0 0.0
    %564 = vmatpush.msra.mxu0 0.0
    %565 = vmatpush.msra.mxu0 0.0
    %566 = vmatpush.msra.mxu0 0.0
    %567 = vmatpush.msra.mxu0 %v125
    %568 = vmatpush.msra.mxu0 %v124
    %569 = vmatpush.msra.mxu0 %v123
    %570 = vmatpush.msra.mxu0 %v122
    %571 = vmatmul.f32.gmra.mxu0 %v553
    %v572 = vpop.f32.mrf.mxu0
    %v573 = vadd.f32 0.0, %v572
    %574 = vdwg.mxu0
    %v575 = vadd.f32 %v118, %v573
    %v576 = vxor.u32 %v575, 2147483648
    %v577 = vmul.f32 %v576, 1.442695
    %v578 = vpow.pop %v577
    %v579 = vadd.f32 %v578, 1.0
    %v580 = vrcp.pop %v579
    %v581 = vmul.f32 %v579, %v580
    %v582 = vsub.f32 1.0, %v581
    %v583 = vmul.f32 %v580, %v582
    %v584 = vadd.f32 %v580, %v583
    %vm585 = vweird.f32 %v579
    %vm586 = vweird.f32 %v580
    %vm587 = vmor %vm585, %vm586
    %v588 = vsel %vm587, %v580, %v584
    %v589 = vand.u32 2147483647, %v579
    %vm590 = vcmp.eq.f32.partialorder %v589, 8.507059e+37
    %v591 = vand.u32 %v579, 2147483648
    %v592 = vor.u32 1.1754944e-38, %v591
    %v593 = vsel %vm590, %v592, %v588
    %v594 = vmul.f32 1.0, %v593
    %v595 = vtanh.pop %v575
    %v596 = vmul.f32 %v594, %v536
    %598 = vrot.lane.b32.xlu0 %v595, 64
    %v599 = vpop.permute.xlu0 %598
    %v601 = vmul.f32 %v594, %v599
    %603 = vrot.lane.b32.xlu0 %v601, 32
    %v604 = vpop.permute.xlu0 %603
    %v606 = vadd.f32 %v596, %v604
    %v607 = vtanh.pop %v606
    %609 = vrot.lane.b32.xlu0 %v607, 64
    %v610 = vpop.permute.xlu0 %609
    %v612 = vmul.f32 %v594, %v610
    %vm613 = vcmp.eq.s32.totalorder %v121, 6
    %v614 = vsel %vm613, 1, 0
    %615 = vset.pattern.permute.xlu0 0
    %616 = vperm.xlu0 %615, %v614
    %v617 = vpop.permute.xlu0 %616
    %vm618 = vcmp.eq.s32.totalorder %v617, 1
    %v619 = vsel %vm618, %v612, %v549
    %v620 = vld [vmem:[%s8] sm:$0xff]
    %v621 = vld [vmem:[%s8 + $0x8] sm:$0xff]
    %v622 = vld [vmem:[%s8 + $0x10] sm:$0xff]
    %v623 = vld [vmem:[%s8 + $0x18] sm:$0xff]
    %v624 = vld [vmem:[%s2] sm:$0xff]
    %v625 = vld [vmem:[%s9] sm:$0xff]
    %v626 = vld [vmem:[%s9 + $0x8] sm:$0xff]
    %v627 = vld [vmem:[%s9 + $0x10] sm:$0xff]
    %v628 = vld [vmem:[%s9 + $0x18] sm:$0xff]
    %v630 = vsel %vm60, %v624, 0
    %632 = vmatpush.msra.mxu0 0.0
    %633 = vmatpush.msra.mxu0 0.0
    %634 = vmatpush.msra.mxu0 0.0
    %635 = vmatpush.msra.mxu0 0.0
    %636 = vmatpush.msra.mxu0 0.0
    %637 = vmatpush.msra.mxu0 0.0
    %638 = vmatpush.msra.mxu0 0.0
    %639 = vmatpush.msra.mxu0 0.0
    %640 = vmatpush.msra.mxu0 0.0
    %641 = vmatpush.msra.mxu0 0.0
    %642 = vmatpush.msra.mxu0 0.0
    %643 = vmatpush.msra.mxu0 0.0
    %644 = vmatpush.msra.mxu0 %v628
    %645 = vmatpush.msra.mxu0 %v627
    %646 = vmatpush.msra.mxu0 %v626
    %647 = vmatpush.msra.mxu0 %v625
    %648 = vmatmul.f32.gmra.mxu0 %v630
    %v649 = vpop.f32.mrf.mxu0
    %v650 = vadd.f32 0.0, %v649
    %651 = vdwg.mxu0
    %653 = vrot.lane.b32.xlu0 %v619, 32
    %v654 = vpop.permute.xlu0 %653
    %v655 = vsel %vm60, %v654, 0
    %657 = vmatpush.msra.mxu0 0.0
    %658 = vmatpush.msra.mxu0 0.0
    %659 = vmatpush.msra.mxu0 0.0
    %660 = vmatpush.msra.mxu0 0.0
    %661 = vmatpush.msra.mxu0 0.0
    %662 = vmatpush.msra.mxu0 0.0
    %663 = vmatpush.msra.mxu0 0.0
    %664 = vmatpush.msra.mxu0 0.0
    %665 = vmatpush.msra.mxu0 0.0
    %666 = vmatpush.msra.mxu0 0.0
    %667 = vmatpush.msra.mxu0 0.0
    %668 = vmatpush.msra.mxu0 0.0
    %669 = vmatpush.msra.mxu0 %v623
    %670 = vmatpush.msra.mxu0 %v622
    %671 = vmatpush.msra.mxu0 %v621
    %672 = vmatpush.msra.mxu0 %v620
    %673 = vmatmul.f32.gmra.mxu0 %v655
    %v674 = vpop.f32.mrf.mxu0
    %v675 = vadd.f32 %v650, %v674
    %676 = vdwg.mxu0
    %v677 = vld [vmem:[%s10] sm:$0x1]
    %v679 = vperm.slane %v677, 0
    %v681 = vadd.f32 %v675, %v679
    %v682 = vmax.f32 %v681, 0.0
    %v683 = vld [vmem:[%s11] sm:$0xff]
    %v684 = vld [vmem:[%s11 + $0x8] sm:$0xff]
    %v685 = vld [vmem:[%s11 + $0x10] sm:$0xff]
    %v686 = vld [vmem:[%s11 + $0x18] sm:$0xff]
    %v687 = vld [vmem:[%s11 + $0x20] sm:$0xff]
    %v688 = vld [vmem:[%s11 + $0x28] sm:$0xff]
    %v689 = vld [vmem:[%s11 + $0x30] sm:$0xff]
    %v690 = vld [vmem:[%s11 + $0x38] sm:$0xff]
    %v691 = vld [vmem:[%s12] sm:$0x1]
    %v693 = vperm.slane %v691, 0
    %vm695 = vcmask 523264
    %v697 = vsel %vm695, %v682, 0
    %699 = vmatpush.msra.mxu0 0.0
    %700 = vmatpush.msra.mxu0 0.0
    %701 = vmatpush.msra.mxu0 0.0
    %702 = vmatpush.msra.mxu0 0.0
    %703 = vmatpush.msra.mxu0 0.0
    %704 = vmatpush.msra.mxu0 0.0
    %705 = vmatpush.msra.mxu0 0.0
    %706 = vmatpush.msra.mxu0 0.0
    %707 = vmatpush.msra.mxu0 %v690
    %708 = vmatpush.msra.mxu0 %v689
    %709 = vmatpush.msra.mxu0 %v688
    %710 = vmatpush.msra.mxu0 %v687
    %711 = vmatpush.msra.mxu0 %v686
    %712 = vmatpush.msra.mxu0 %v685
    %713 = vmatpush.msra.mxu0 %v684
    %714 = vmatpush.msra.mxu0 %v683
    %715 = vmatmul.f32.gmra.mxu0 %v697
    %v716 = vpop.f32.mrf.mxu0
    %v717 = vadd.f32 %v693, %v716
    %718 = vdwg.mxu0
    %v719 = vxor.u32 %v717, 2147483648
    %v720 = vmul.f32 %v719, 1.442695
    %v721 = vpow.pop %v720
    %v722 = vadd.f32 %v721, 1.0
    %v723 = vrcp.pop %v722
    %v724 = vmul.f32 %v722, %v723
    %v725 = vsub.f32 1.0, %v724
    %v726 = vmul.f32 %v723, %v725
    %v727 = vadd.f32 %v723, %v726
    %vm728 = vweird.f32 %v722
    %vm729 = vweird.f32 %v723
    %vm730 = vmor %vm728, %vm729
    %v731 = vsel %vm730, %v723, %v727
    %v732 = vand.u32 2147483647, %v722
    %vm733 = vcmp.eq.f32.partialorder %v732, 8.507059e+37
    %v734 = vand.u32 %v722, 2147483648
    %v735 = vor.u32 1.1754944e-38, %v734
    %v736 = vsel %vm733, %v735, %v731
    %v737 = vmul.f32 1.0, %v736
    %vm738 = vcmask 64512
    %739 = vst.msk [vmem:[#allocation2] sm:$0xff] %vm738, %v737
    // Predicated region
    $region54: #{tpu_custom_call.1} parent=1 // pred_check
      _
    $region55: #{tpu_custom_call.1} parent=1 // pred_check_branch
      %741 = sbr.rel (0) target = $region57
    $region56: #{tpu_custom_call.1} parent=1 // pred_region
      %743 = vsyncadd [#allocation3], 0
      %s745 = sshll.u32 [#allocation2], 4
      %s746 = int_to_ptr.vmem [resolvable:$true] %s745
      %s747 = sshll.u32 %s13, 4
      %s748 = int_to_ptr.hbm [resolvable:$true] %s747
      %750 = dma.vmem_to_hbm [thread:$0]  %s746, 128, %s748, [#allocation3]
    $region57: #{tpu_custom_call.1} parent=1 // pred_fallthru
      _
    // Predicated region
    $region58: #{tpu_custom_call.1} parent=1 // pred_check
      _
    $region59: #{tpu_custom_call.1} parent=1 // pred_check_branch
      %752 = sbr.rel (0) target = $region61
    $region60: #{tpu_custom_call.1} parent=1 // pred_region
      %754 = dma.done [#allocation3], 128
    $region61: #{tpu_custom_call.1} parent=1 // pred_fallthru
      _
    %755 = vsyncpa [#allocation3], 1

</llo_original>
